<compile_context>
chip_gen: v5e
topology: v5e:2x2
jax: 0.10.0
libtpu: 0.0.40
codegen_flags: <defaults>
</compile_context>

<pallas_src>
import math

import jax
import jax.numpy as jnp
from jax.experimental import pallas as pl
from jax.experimental.pallas import tpu as pltpu

_LANE = 128
_SUBLANE = 8
_DEFAULT_BLOCK_BYTES = 4 << 20  # 4 MiB per x block (dtype-aware via itemsize)


def _round_up(v: int, m: int) -> int:
    return ((v + m - 1) // m) * m


def _block_target_bytes() -> int:
    """Target bytes per x block.

    4 MiB double-buffered (input + output) is 16 MiB of VMEM, which fits every
    TPU generation once the scoped-VMEM limit is raised to 32 MiB (v7x physical
    VMEM is 64 MiB; v5e/v6e have 128 MiB).
    """
    try:
        vmem = pltpu.get_tpu_info().vmem_capacity_bytes
    except Exception:  # hardware query unavailable -> safe default
        vmem = 128 << 20
    return int(min(_DEFAULT_BLOCK_BYTES, vmem // 16))


def _drop_path_kernel(scale_ref, x_ref, o_ref):
    """One grid cell = a (TB, TN) slab covering TB samples x TN features.

    scale_ref: (TB, 1) per-sample scale in x.dtype (0 or 1/keep_prob),
    broadcast along the lane (feature) axis.  Native-dtype multiply — no f32
    promotion, no trailing cast.
    """
    o_ref[...] = x_ref[...] * scale_ref[...]


def drop_path(x, drop_prob: float = 0.0, training: bool = False,
              scale_by_keep: bool = True, rng=None, donate_x: bool = False):
    """Pallas implementation of timm/PyTorch-style drop_path (forward only)."""
    if drop_prob == 0.0 or not training:
        return x
    keep_prob = 1.0 - drop_prob

    if rng is None:
        # TODO(synk): callers should pass an explicit key; this fallback makes
        # repeated calls reuse the same mask (DropPath class below advances
        # its own key to mirror PyTorch's stateful RNG).
        rng = jax.random.PRNGKey(0)

    B = int(x.shape[0])
    n = int(math.prod(x.shape[1:]))  # 1 if x is 1-D

    # Per-sample Bernoulli(keep_prob); precompute scale = keep * 1/keep_prob
    # (or keep * 1 when not scale_by_keep), cast to x.dtype so the in-kernel
    # multiply stays in the native dtype.
    keep = jax.random.bernoulli(rng, p=keep_prob, shape=(B,))
    on_val = (1.0 / keep_prob) if (scale_by_keep and keep_prob > 0.0) else 1.0
    scale = jnp.where(keep, on_val, 0.0).astype(x.dtype).reshape(B, 1)

    x2 = x.reshape(B, n)  # free metadata reshape; no pad / slice passes

    itemsize = jnp.dtype(x.dtype).itemsize
    target = _block_target_bytes()
    lane_rows = int(pl.cdiv(n, _LANE))  # number of 128-lane groups per sample

    # Sublane (batch) tile: pack samples so small per-sample feature sizes
    # still give multi-MiB blocks.  TB must be a multiple of 8 or equal B.
    if B <= _SUBLANE:
        TB = B
    else:
        per_sample_bytes = max(1, lane_rows * _LANE * itemsize)
        want = target // per_sample_bytes
        TB = int(min(max(_SUBLANE, _round_up(int(want), _SUBLANE)),
                     _round_up(B, _SUBLANE)))

    # Lane (feature) tile: multiple of 128, sized so TB*TN*itemsize ~= target.
    tn_rows = max(1, target // (TB * _LANE * itemsize))
    tn_rows = min(int(tn_rows), lane_rows)
    TN = tn_rows * _LANE

    grid = (int(pl.cdiv(B, TB)), int(pl.cdiv(n, TN)))

    out2 = pl.pallas_call(
        _drop_path_kernel,
        out_shape=jax.ShapeDtypeStruct((B, n), x.dtype),
        grid=grid,
        in_specs=[
            pl.BlockSpec((TB, 1), lambda b, t: (b, 0)),     # per-sample scale
            pl.BlockSpec((TB, TN), lambda b, t: (b, t)),    # activations
        ],
        out_specs=pl.BlockSpec((TB, TN), lambda b, t: (b, t)),
        compiler_params=pltpu.CompilerParams(
            dimension_semantics=("parallel", "parallel"),
            vmem_limit_bytes=32 << 20,
        ),
        # Reuse x's HBM buffer for the output when the caller donates x.
        input_output_aliases=({1: 0} if donate_x else {}),
    )(scale, x2)

    return out2.reshape(x.shape)


class DropPath:
    """Mirror of the PyTorch DropPath module (forward pass only)."""

    def __init__(self, drop_prob=None, scale_by_keep=True, rng=None):
        self.drop_prob = drop_prob
        self.scale_by_keep = scale_by_keep
        self.training = True  # PyTorch modules default to training mode
        self._rng = rng if rng is not None else jax.random.PRNGKey(0)

    def __call__(self, x, rng=None):
        if rng is None:
            # Mirror PyTorch's stateful global RNG: advance our own key so
            # repeated calls draw fresh masks.
            self._rng, rng = jax.random.split(self._rng)
        return drop_path(x, self.drop_prob or 0.0, self.training,
                         self.scale_by_keep, rng=rng)


if __name__ == "__main__":
    key = jax.random.PRNGKey(0)
    # Small NCHW input consistent with the module's usage: (B, C, H, W)
    x = jax.random.normal(key, (2, 4, 16, 16), dtype=jnp.float32)

    module = DropPath(drop_prob=0.3, scale_by_keep=True)

    # Training path (stochastic, through the Pallas kernel)
    y_train = jax.block_until_ready(module(x, rng=jax.random.PRNGKey(123)))

    # Sanity: every sample's output is either 0 or x / keep_prob.
    keep_prob = 1.0 - 0.3
    for b in range(x.shape[0]):
        is_dropped = bool(jnp.allclose(y_train[b], 0.0))
        is_kept = bool(jnp.allclose(y_train[b], x[b] / keep_prob,
                                    rtol=1e-5, atol=1e-5))
        assert is_dropped or is_kept, "per-sample mask semantics violated"

    # Ragged batch (B % 8 != 0), ragged features (n % 128 != 0), bf16 dtype —
    # exercises the masked boundary blocks and the native-dtype multiply.
    xr = jax.random.normal(jax.random.PRNGKey(1), (10, 3, 7, 5),
                           dtype=jnp.bfloat16)
    yr = jax.block_until_ready(
        drop_path(xr, 0.5, training=True, scale_by_keep=True,
                  rng=jax.random.PRNGKey(7)))
    for b in range(xr.shape[0]):
        yb = yr[b].astype(jnp.float32)
        xb = xr[b].astype(jnp.float32)
        is_dropped = bool(jnp.allclose(yb, 0.0))
        is_kept = bool(jnp.allclose(yb, xb * 2.0, rtol=1e-2, atol=1e-3))
        assert is_dropped or is_kept, "ragged/bf16 mask semantics violated"

    # Eval path (identity, matches drop_prob==0 / training==False branch)
    module.training = False
    y_eval = jax.block_until_ready(module(x))
    assert jnp.array_equal(y_eval, x)

    print("KERNEL_OK")
</pallas_src>

<mosaic_0001>
module attributes {stable_mosaic.version = 11 : i64} {
  func.func @_drop_path_kernel(%arg0: i32, %arg1: i32, %arg2: memref<2x1xf32, #tpu.memory_space<vmem>>, %arg3: memref<2x1024xf32, #tpu.memory_space<vmem>>, %arg4: memref<2x1024xf32, #tpu.memory_space<vmem>>) attributes {dimension_semantics = [#tpu.dimension_semantics<parallel>, #tpu.dimension_semantics<parallel>], iteration_bounds = array<i64: 1, 1>, scalar_prefetch = 0 : i64, scratch_operands = 0 : i64, tpu.core_type = #tpu.core_type<tc>, window_params = [{transform_indices = @transform_0, window_bounds = array<i64: 2, 1>}, {transform_indices = @transform_1, window_bounds = array<i64: 2, 1024>}, {transform_indices = @transform_2, window_bounds = array<i64: 2, 1024>}]} {
    %c0 = arith.constant 0 : index
    %c0_0 = arith.constant 0 : index
    %0 = vector.load %arg3[%c0, %c0_0] : memref<2x1024xf32, #tpu.memory_space<vmem>>, vector<2x1024xf32>
    %c0_1 = arith.constant 0 : index
    %c0_2 = arith.constant 0 : index
    %1 = vector.load %arg2[%c0_1, %c0_2] : memref<2x1xf32, #tpu.memory_space<vmem>>, vector<2x1xf32>
    %2 = vector.broadcast %1 : vector<2x1xf32> to vector<2x1024xf32>
    %3 = arith.mulf %0, %2 : vector<2x1024xf32>
    %c0_3 = arith.constant 0 : index
    %c0_4 = arith.constant 0 : index
    %4 = vector.load %arg4[%c0_3, %c0_4] : memref<2x1024xf32, #tpu.memory_space<vmem>>, vector<2x1024xf32>
    tpu.vector_store %arg4[%c0_3, %c0_4], %3 {strides = array<i32>} : memref<2x1024xf32, #tpu.memory_space<vmem>>, vector<2x1024xf32>,
    return
  }
  func.func @transform_0(%arg0: i32, %arg1: i32) -> (i32, i32) {
    %c0_i32 = arith.constant 0 : i32
    %c0_i32_0 = arith.constant 0 : i32
    return %arg0, %c0_i32 : i32, i32
  }
  func.func @transform_1(%arg0: i32, %arg1: i32) -> (i32, i32) {
    %c0_i32 = arith.constant 0 : i32
    return %arg0, %arg1 : i32, i32
  }
  func.func @transform_2(%arg0: i32, %arg1: i32) -> (i32, i32) {
    %c0_i32 = arith.constant 0 : i32
    return %arg0, %arg1 : i32, i32
  }
}

</mosaic_0001>

<llo_original>
// kernel: tpu_custom_call.1
$region0: #{tpu_custom_call.1}
  #allocation0 [shape = 'u32[]', space=smem, size = 0x4, offset = 0x4, fixed_abs, tag = 'smem constant byte address 0x4 - core index']
  #allocation1 [shape = 'u32[72,128]{1,0:T(1,128)}', space=vmem, size = 0x9000, scoped, tag = 'internal scratch']
  %s0 = inlined_call_operand.vmem [shape: f32[2,1], index: 0, kind: input, shape index: {}]
  %s1 = inlined_call_operand.hbm [shape: f32[2,1024], index: 1, kind: input, shape index: {}]
  %s2 = inlined_call_operand.hbm [shape: f32[2,1024], index: 2, kind: output, shape index: {}]
  %s3 = sld [smem:[#allocation0]]
  $region22: #{tpu_custom_call.1} parent=0
    _
  %s5 = ssub.s32 1, %s3
  %s6 = scalar_select 0, %s5, %s3
  $region1: #{tpu_custom_call.1} parent=0
    #allocation2 [shape = 'u8[8192]{0}', space=vmem, size = 0x2000, scoped, tag = 'input window, operand 1, single buffered']
    #allocation3 [shape = 's32[1]{0}', space=sflag, size = 0x4, scoped, tag = 'scoped memory for tpu_custom_call.1']
    #allocation4 [shape = 's32[1]{0}', space=sflag, size = 0x4, scoped, tag = 'scoped memory for tpu_custom_call.1']
    #allocation5 [shape = 'u8[8192]{0}', space=vmem, size = 0x2000, scoped, tag = 'output window, operand 0, single buffered']
    %7 = vsyncpa [#allocation3], 0
    %8 = vsyncpa [#allocation4], 0
    // Predicated region
    $region2: #{tpu_custom_call.1} parent=1 // pred_check
      _
    $region3: #{tpu_custom_call.1} parent=1 // pred_check_branch
      %10 = sbr.rel (0) target = $region5
    $region4: #{tpu_custom_call.1} parent=1 // pred_region
      _
    $region5: #{tpu_custom_call.1} parent=1 // pred_fallthru
      _
    // Predicated region
    $region6: #{tpu_custom_call.1} parent=1 // pred_check
      _
    $region7: #{tpu_custom_call.1} parent=1 // pred_check_branch
      %12 = sbr.rel (0) target = $region9
    $region8: #{tpu_custom_call.1} parent=1 // pred_region
      %14 = vsyncadd [#allocation3], 0
      %s16 = sshll.u32 %s1, 4
      %s17 = int_to_ptr.hbm [resolvable:$true] %s16
      %s18 = sshll.u32 [#allocation2], 4
      %s19 = int_to_ptr.vmem [resolvable:$true] %s18
      %21 = dma.hbm_to_vmem [thread:$0]  %s17, 256, %s19, [#allocation3]
    $region9: #{tpu_custom_call.1} parent=1 // pred_fallthru
      _
    // Predicated region
    $region10: #{tpu_custom_call.1} parent=1 // pred_check
      _
    $region11: #{tpu_custom_call.1} parent=1 // pred_check_branch
      %23 = sbr.rel (0) target = $region13
    $region12: #{tpu_custom_call.1} parent=1 // pred_region
      %25 = dma.done [#allocation3], 256
    $region13: #{tpu_custom_call.1} parent=1 // pred_fallthru
      _
    %v26 = vld [vmem:[#allocation2] sm:$0xff]
    %v27 = vld [vmem:[#allocation2 + $0x8] sm:$0xff]
    %v28 = vld [vmem:[%s0] sm:$0x3]
    %30 = vset.pattern.permute.xlu0 0
    %31 = vperm.xlu0 %30, %v28
    %v32 = vpop.permute.xlu0 %31
    %v34 = vunpack.c.l.s4 269488144
    %v35 = vunpack.c.0.s8 %v34
    %v36 = vperm.slane %v32, %v35
    %v38 = vmul.f32 %v26, %v36
    %v39 = vmul.f32 %v27, %v36
    %40 = vst [vmem:[#allocation5] sm:$0xff] %v38
    %41 = vst [vmem:[#allocation5 + $0x8] sm:$0xff] %v39
    // Predicated region
    $region14: #{tpu_custom_call.1} parent=1 // pred_check
      _
    $region15: #{tpu_custom_call.1} parent=1 // pred_check_branch
      %43 = sbr.rel (0) target = $region17
    $region16: #{tpu_custom_call.1} parent=1 // pred_region
      %45 = vsyncadd [#allocation4], 0
      %s47 = sshll.u32 [#allocation5], 4
      %s48 = int_to_ptr.vmem [resolvable:$true] %s47
      %s49 = sshll.u32 %s2, 4
      %s50 = int_to_ptr.hbm [resolvable:$true] %s49
      %52 = dma.vmem_to_hbm [thread:$0]  %s48, 256, %s50, [#allocation4]
    $region17: #{tpu_custom_call.1} parent=1 // pred_fallthru
      _
    // Predicated region
    $region18: #{tpu_custom_call.1} parent=1 // pred_check
      _
    $region19: #{tpu_custom_call.1} parent=1 // pred_check_branch
      %54 = sbr.rel (0) target = $region21
    $region20: #{tpu_custom_call.1} parent=1 // pred_region
      %56 = dma.done [#allocation4], 256
    $region21: #{tpu_custom_call.1} parent=1 // pred_fallthru
      _
    %57 = vsyncpa [#allocation3], 1
    %58 = vsyncpa [#allocation4], 1

</llo_original>
